<compile_context>
chip_gen: v5e
topology: v5e:2x2
jax: 0.10.0
libtpu: 0.0.40
codegen_flags: <defaults>
</compile_context>

<pallas_src>
import functools

import jax
import jax.numpy as jnp
from jax import lax
from jax.experimental import pallas as pl
from jax.experimental.pallas import tpu as pltpu

KSIZE = 5
PAD = 2


def _kept_taps():
    """Taps kept by the type-'A' raster-causal mask (strictly before the center)."""
    taps = []
    for kh in range(KSIZE):
        for kw in range(KSIZE):
            if kh < KSIZE // 2 or (kh == KSIZE // 2 and kw < KSIZE // 2):
                taps.append((kh, kw))
    return tuple(taps)


TAPS = _kept_taps()      # 12 of the 25 taps
NTAPS = len(TAPS)


def _entropy_conv_kernel(x_ref, w_ref, b_ref, a_ref, o_ref, xp_ref, pm_ref,
                         *, H, W, Cin):
    """One batch element per grid step.

    x_ref  : (Cin, H*W)              NCHW input, spatial flattened (lane-dense)
    w_ref  : (Cout, NTAPS*Cin)       repacked masked grouped weights
    b_ref  : (Cout, 1)               bias
    a_ref  : (Cout, 1)               PReLU per-channel slope
    o_ref  : (Cout, H*W)             trimmed output, spatial flattened (lane-dense)
    xp_ref : VMEM (Cin, Hp*Wp) f32   zero-padded input, rows flattened contiguously
    pm_ref : VMEM (NTAPS*Cin, H*Wp)  im2col patch matrix
    """
    Hp, Wp = H + 2 * PAD, W + 2 * PAD
    HWp = H * Wp

    # Zero the padded scratch, then copy the input rows into its interior.
    # (Zeroing every step keeps the kernel correct under megacore sharding of the
    #  "parallel" grid axis; it is a ~16 KiB memset -- negligible.)
    xp_ref[...] = jnp.zeros_like(xp_ref)
    for h in range(H):
        dst = (h + PAD) * Wp + PAD
        xp_ref[:, dst:dst + W] = x_ref[:, h * W:(h + 1) * W].astype(xp_ref.dtype)

    # im2col: in the flattened padded layout every kept 5x5 tap is a contiguous
    # (Cin, H*Wp) slab starting at offset kh*Wp + kw.  Only the 12 non-masked taps.
    for t, (kh, kw) in enumerate(TAPS):
        off = kh * Wp + kw
        pm_ref[t * Cin:(t + 1) * Cin, :] = xp_ref[:, off:off + HWp]

    # Single MXU contraction: (Cout, K) @ (K, H*Wp) with K = NTAPS*Cin.
    acc = jnp.dot(w_ref[...], pm_ref[...], preferred_element_type=jnp.float32)

    # Bias + PReLU, lane-dense over H*Wp.
    z = acc + b_ref[...]
    y = jnp.where(z > 0, z, a_ref[...] * z)

    # In-kernel trim of the (Wp - W) wrap-around columns per row: static lane slices
    # (XLU lane shifts, off the critical MXU path).  The HBM writeback is a single
    # dense (Cout, H*W) block -- no extra output-sized HBM pass in the wrapper.
    for h in range(H):
        o_ref[:, h * W:(h + 1) * W] = y[:, h * Wp:h * Wp + W].astype(o_ref.dtype)


@jax.jit
def entropy_conv_forward(x_nchw, weight, bias, alpha):
    """x_nchw: (N, ngroups*cin, H, W)  ->  (N, ngroups*cout, H, W)."""
    N, cin_total, H, W = x_nchw.shape
    cout_total = weight.shape[-1]
    Hp, Wp = H + 2 * PAD, W + 2 * PAD

    # Free (bitcast) reshape: keep NCHW, flatten spatial to the lane dimension.
    x_flat = x_nchw.reshape(N, cin_total, H * W)

    # Repack only the 12 non-masked taps into a lane-dense 2D weight tile
    # (Cout, NTAPS*Cin); w2[co, t*Cin + ci] = weight[kh_t, kw_t, ci, co].
    w_taps = jnp.stack([weight[kh, kw] for kh, kw in TAPS], axis=0)   # (T, Cin, Cout)
    w2 = jnp.transpose(w_taps, (2, 0, 1)).reshape(cout_total, NTAPS * cin_total)

    b2 = bias.reshape(cout_total, 1)
    a2 = alpha.reshape(cout_total, 1)

    kernel = functools.partial(_entropy_conv_kernel, H=H, W=W, Cin=cin_total)
    out_flat = pl.pallas_call(
        kernel,
        out_shape=jax.ShapeDtypeStruct((N, cout_total, H * W), x_nchw.dtype),
        grid=(N,),
        in_specs=[
            pl.BlockSpec((None, cin_total, H * W), lambda b: (b, 0, 0)),
            pl.BlockSpec((cout_total, NTAPS * cin_total), lambda b: (0, 0)),
            pl.BlockSpec((cout_total, 1), lambda b: (0, 0)),
            pl.BlockSpec((cout_total, 1), lambda b: (0, 0)),
        ],
        out_specs=pl.BlockSpec((None, cout_total, H * W), lambda b: (b, 0, 0)),
        scratch_shapes=[
            pltpu.VMEM((cin_total, Hp * Wp), jnp.float32),
            pltpu.VMEM((NTAPS * cin_total, H * Wp), jnp.float32),
        ],
        compiler_params=pltpu.CompilerParams(
            dimension_semantics=("parallel",)),
    )(x_flat, w2, b2, a2)

    # Free bitcast back to NCHW.  PseudoFillV2(0, npart=1) -> identity.
    return out_flat.reshape(N, cout_total, H, W)


def make_params(key, ngroups, cin, cout):
    """Deterministic masked, grouped (block-diagonal) conv weights + PReLU params."""
    cin_total, cout_total = ngroups * cin, ngroups * cout
    k_w, k_b, k_a = jax.random.split(key, 3)

    # Type-'A' raster-causal mask, built from the SAME tap predicate the kernel uses.
    mask = jnp.zeros((KSIZE, KSIZE), dtype=jnp.float32)
    for kh, kw in TAPS:
        mask = mask.at[kh, kw].set(1.0)
    mask = mask[:, :, None, None]                                # (5,5,1,1)

    # Grouped weights -> block-diagonal dense (5,5,Cin_total,Cout_total).
    w_g = jax.random.normal(k_w, (ngroups, KSIZE, KSIZE, cin, cout),
                            dtype=jnp.float32) * 0.1
    w = jnp.zeros((KSIZE, KSIZE, cin_total, cout_total), dtype=jnp.float32)
    for g in range(ngroups):
        w = w.at[:, :, g * cin:(g + 1) * cin,
                 g * cout:(g + 1) * cout].set(w_g[g])
    w = w * mask                                                 # apply conv mask

    b = jax.random.normal(k_b, (cout_total,), dtype=jnp.float32) * 0.05
    a = 0.25 + 0.05 * jax.random.normal(k_a, (cout_total,), dtype=jnp.float32)
    return w, b, a


def reference_forward(x_nchw, weight, bias, alpha):
    """Pure-JAX reference (lax conv) for correctness checking."""
    x_nhwc = jnp.transpose(x_nchw, (0, 2, 3, 1))
    xp = jnp.pad(x_nhwc, ((0, 0), (PAD, PAD), (PAD, PAD), (0, 0)))
    y = lax.conv_general_dilated(
        xp, weight, window_strides=(1, 1), padding="VALID",
        dimension_numbers=("NHWC", "HWIO", "NHWC"))
    y = y + bias[None, None, None, :]
    y = jnp.where(y > 0, y, alpha[None, None, None, :] * y)
    return jnp.transpose(y, (0, 3, 1, 2))


if __name__ == "__main__":
    # Small synthetic config: ngroups=2, cin=4, cout=4, hidden=8 (unused),
    # npart=1, batch=2, spatial=16x16.
    ngroups, cin, cout, hidden, npart = 2, 4, 4, 8, 1
    N, H, W = 2, 16, 16

    key = jax.random.PRNGKey(0)
    k_x, k_p = jax.random.split(key)
    x = jax.random.normal(k_x, (N, ngroups * cin, H, W), dtype=jnp.float32)
    weight, bias, alpha = make_params(k_p, ngroups, cin, cout)

    out = jax.block_until_ready(entropy_conv_forward(x, weight, bias, alpha))
    ref = jax.block_until_ready(reference_forward(x, weight, bias, alpha))

    assert out.shape == (N, ngroups * cout, H, W), out.shape
    assert jnp.allclose(out, ref, atol=1e-4, rtol=1e-4), \
        float(jnp.max(jnp.abs(out - ref)))

    print("KERNEL_OK")
</pallas_src>

<mosaic_0001>
module attributes {stable_mosaic.version = 11 : i64} {
  func.func @_entropy_conv_kernel(%arg0: i32, %arg1: memref<1x8x256xf32, #tpu.memory_space<vmem>>, %arg2: memref<8x96xf32, #tpu.memory_space<vmem>>, %arg3: memref<8x1xf32, #tpu.memory_space<vmem>>, %arg4: memref<8x1xf32, #tpu.memory_space<vmem>>, %arg5: memref<1x8x256xf32, #tpu.memory_space<vmem>>, %arg6: memref<8x400xf32, #tpu.memory_space<vmem>>, %arg7: memref<96x320xf32, #tpu.memory_space<vmem>>) attributes {dimension_semantics = [#tpu.dimension_semantics<parallel>], iteration_bounds = array<i64: 2>, scalar_prefetch = 0 : i64, scratch_operands = 2 : i64, tpu.core_type = #tpu.core_type<tc>, window_params = [{transform_indices = @transform_0, window_bounds = array<i64: 1, 8, 256>}, {pipeline_mode = #tpu.pipeline_mode<synchronous>, transform_indices = @transform_1, window_bounds = array<i64: 8, 96>}, {pipeline_mode = #tpu.pipeline_mode<synchronous>, transform_indices = @transform_2, window_bounds = array<i64: 8, 1>}, {pipeline_mode = #tpu.pipeline_mode<synchronous>, transform_indices = @transform_3, window_bounds = array<i64: 8, 1>}, {transform_indices = @transform_4, window_bounds = array<i64: 1, 8, 256>}]} {
    %cst = arith.constant 0.000000e+00 : f32
    %0 = vector.broadcast %cst : f32 to vector<8x400xf32>
    %c0 = arith.constant 0 : index
    %c0_0 = arith.constant 0 : index
    %1 = vector.load %arg6[%c0, %c0_0] : memref<8x400xf32, #tpu.memory_space<vmem>>, vector<8x400xf32>
    tpu.vector_store %arg6[%c0, %c0_0], %0 {strides = array<i32>} : memref<8x400xf32, #tpu.memory_space<vmem>>, vector<8x400xf32>,
    %c0_1 = arith.constant 0 : index
    %c0_2 = arith.constant 0 : index
    %c0_3 = arith.constant 0 : index
    %2 = vector.load %arg1[%c0_1, %c0_2, %c0_3] : memref<1x8x256xf32, #tpu.memory_space<vmem>>, vector<1x8x16xf32>
    %3 = vector.shape_cast %2 : vector<1x8x16xf32> to vector<8x16xf32>
    %c0_4 = arith.constant 0 : index
    %c42 = arith.constant 42 : index
    %4 = vector.load %arg6[%c0_4, %c42] : memref<8x400xf32, #tpu.memory_space<vmem>>, vector<8x16xf32>
    tpu.vector_store %arg6[%c0_4, %c42], %3 {strides = array<i32>} : memref<8x400xf32, #tpu.memory_space<vmem>>, vector<8x16xf32>,
    %c0_5 = arith.constant 0 : index
    %c0_6 = arith.constant 0 : index
    %c16 = arith.constant 16 : index
    %5 = vector.load %arg1[%c0_5, %c0_6, %c16] : memref<1x8x256xf32, #tpu.memory_space<vmem>>, vector<1x8x16xf32>
    %6 = vector.shape_cast %5 : vector<1x8x16xf32> to vector<8x16xf32>
    %c0_7 = arith.constant 0 : index
    %c62 = arith.constant 62 : index
    %7 = vector.load %arg6[%c0_7, %c62] : memref<8x400xf32, #tpu.memory_space<vmem>>, vector<8x16xf32>
    tpu.vector_store %arg6[%c0_7, %c62], %6 {strides = array<i32>} : memref<8x400xf32, #tpu.memory_space<vmem>>, vector<8x16xf32>,
    %c0_8 = arith.constant 0 : index
    %c0_9 = arith.constant 0 : index
    %c32 = arith.constant 32 : index
    %8 = vector.load %arg1[%c0_8, %c0_9, %c32] : memref<1x8x256xf32, #tpu.memory_space<vmem>>, vector<1x8x16xf32>
    %9 = vector.shape_cast %8 : vector<1x8x16xf32> to vector<8x16xf32>
    %c0_10 = arith.constant 0 : index
    %c82 = arith.constant 82 : index
    %10 = vector.load %arg6[%c0_10, %c82] : memref<8x400xf32, #tpu.memory_space<vmem>>, vector<8x16xf32>
    tpu.vector_store %arg6[%c0_10, %c82], %9 {strides = array<i32>} : memref<8x400xf32, #tpu.memory_space<vmem>>, vector<8x16xf32>,
    %c0_11 = arith.constant 0 : index
    %c0_12 = arith.constant 0 : index
    %c48 = arith.constant 48 : index
    %11 = vector.load %arg1[%c0_11, %c0_12, %c48] : memref<1x8x256xf32, #tpu.memory_space<vmem>>, vector<1x8x16xf32>
    %12 = vector.shape_cast %11 : vector<1x8x16xf32> to vector<8x16xf32>
    %c0_13 = arith.constant 0 : index
    %c102 = arith.constant 102 : index
    %13 = vector.load %arg6[%c0_13, %c102] : memref<8x400xf32, #tpu.memory_space<vmem>>, vector<8x16xf32>
    tpu.vector_store %arg6[%c0_13, %c102], %12 {strides = array<i32>} : memref<8x400xf32, #tpu.memory_space<vmem>>, vector<8x16xf32>,
    %c0_14 = arith.constant 0 : index
    %c0_15 = arith.constant 0 : index
    %c64 = arith.constant 64 : index
    %14 = vector.load %arg1[%c0_14, %c0_15, %c64] : memref<1x8x256xf32, #tpu.memory_space<vmem>>, vector<1x8x16xf32>
    %15 = vector.shape_cast %14 : vector<1x8x16xf32> to vector<8x16xf32>
    %c0_16 = arith.constant 0 : index
    %c122 = arith.constant 122 : index
    %16 = vector.load %arg6[%c0_16, %c122] : memref<8x400xf32, #tpu.memory_space<vmem>>, vector<8x16xf32>
    tpu.vector_store %arg6[%c0_16, %c122], %15 {strides = array<i32>} : memref<8x400xf32, #tpu.memory_space<vmem>>, vector<8x16xf32>,
    %c0_17 = arith.constant 0 : index
    %c0_18 = arith.constant 0 : index
    %c80 = arith.constant 80 : index
    %17 = vector.load %arg1[%c0_17, %c0_18, %c80] : memref<1x8x256xf32, #tpu.memory_space<vmem>>, vector<1x8x16xf32>
    %18 = vector.shape_cast %17 : vector<1x8x16xf32> to vector<8x16xf32>
    %c0_19 = arith.constant 0 : index
    %c142 = arith.constant 142 : index
    %19 = vector.load %arg6[%c0_19, %c142] : memref<8x400xf32, #tpu.memory_space<vmem>>, vector<8x16xf32>
    tpu.vector_store %arg6[%c0_19, %c142], %18 {strides = array<i32>} : memref<8x400xf32, #tpu.memory_space<vmem>>, vector<8x16xf32>,
    %c0_20 = arith.constant 0 : index
    %c0_21 = arith.constant 0 : index
    %c96 = arith.constant 96 : index
    %20 = vector.load %arg1[%c0_20, %c0_21, %c96] : memref<1x8x256xf32, #tpu.memory_space<vmem>>, vector<1x8x16xf32>
    %21 = vector.shape_cast %20 : vector<1x8x16xf32> to vector<8x16xf32>
    %c0_22 = arith.constant 0 : index
    %c162 = arith.constant 162 : index
    %22 = vector.load %arg6[%c0_22, %c162] : memref<8x400xf32, #tpu.memory_space<vmem>>, vector<8x16xf32>
    tpu.vector_store %arg6[%c0_22, %c162], %21 {strides = array<i32>} : memref<8x400xf32, #tpu.memory_space<vmem>>, vector<8x16xf32>,
    %c0_23 = arith.constant 0 : index
    %c0_24 = arith.constant 0 : index
    %c112 = arith.constant 112 : index
    %23 = vector.load %arg1[%c0_23, %c0_24, %c112] : memref<1x8x256xf32, #tpu.memory_space<vmem>>, vector<1x8x16xf32>
    %24 = vector.shape_cast %23 : vector<1x8x16xf32> to vector<8x16xf32>
    %c0_25 = arith.constant 0 : index
    %c182 = arith.constant 182 : index
    %25 = vector.load %arg6[%c0_25, %c182] : memref<8x400xf32, #tpu.memory_space<vmem>>, vector<8x16xf32>
    tpu.vector_store %arg6[%c0_25, %c182], %24 {strides = array<i32>} : memref<8x400xf32, #tpu.memory_space<vmem>>, vector<8x16xf32>,
    %c0_26 = arith.constant 0 : index
    %c0_27 = arith.constant 0 : index
    %c128 = arith.constant 128 : index
    %26 = vector.load %arg1[%c0_26, %c0_27, %c128] : memref<1x8x256xf32, #tpu.memory_space<vmem>>, vector<1x8x16xf32>
    %27 = vector.shape_cast %26 : vector<1x8x16xf32> to vector<8x16xf32>
    %c0_28 = arith.constant 0 : index
    %c202 = arith.constant 202 : index
    %28 = vector.load %arg6[%c0_28, %c202] : memref<8x400xf32, #tpu.memory_space<vmem>>, vector<8x16xf32>
    tpu.vector_store %arg6[%c0_28, %c202], %27 {strides = array<i32>} : memref<8x400xf32, #tpu.memory_space<vmem>>, vector<8x16xf32>,
    %c0_29 = arith.constant 0 : index
    %c0_30 = arith.constant 0 : index
    %c144 = arith.constant 144 : index
    %29 = vector.load %arg1[%c0_29, %c0_30, %c144] : memref<1x8x256xf32, #tpu.memory_space<vmem>>, vector<1x8x16xf32>
    %30 = vector.shape_cast %29 : vector<1x8x16xf32> to vector<8x16xf32>
    %c0_31 = arith.constant 0 : index
    %c222 = arith.constant 222 : index
    %31 = vector.load %arg6[%c0_31, %c222] : memref<8x400xf32, #tpu.memory_space<vmem>>, vector<8x16xf32>
    tpu.vector_store %arg6[%c0_31, %c222], %30 {strides = array<i32>} : memref<8x400xf32, #tpu.memory_space<vmem>>, vector<8x16xf32>,
    %c0_32 = arith.constant 0 : index
    %c0_33 = arith.constant 0 : index
    %c160 = arith.constant 160 : index
    %32 = vector.load %arg1[%c0_32, %c0_33, %c160] : memref<1x8x256xf32, #tpu.memory_space<vmem>>, vector<1x8x16xf32>
    %33 = vector.shape_cast %32 : vector<1x8x16xf32> to vector<8x16xf32>
    %c0_34 = arith.constant 0 : index
    %c242 = arith.constant 242 : index
    %34 = vector.load %arg6[%c0_34, %c242] : memref<8x400xf32, #tpu.memory_space<vmem>>, vector<8x16xf32>
    tpu.vector_store %arg6[%c0_34, %c242], %33 {strides = array<i32>} : memref<8x400xf32, #tpu.memory_space<vmem>>, vector<8x16xf32>,
    %c0_35 = arith.constant 0 : index
    %c0_36 = arith.constant 0 : index
    %c176 = arith.constant 176 : index
    %35 = vector.load %arg1[%c0_35, %c0_36, %c176] : memref<1x8x256xf32, #tpu.memory_space<vmem>>, vector<1x8x16xf32>
    %36 = vector.shape_cast %35 : vector<1x8x16xf32> to vector<8x16xf32>
    %c0_37 = arith.constant 0 : index
    %c262 = arith.constant 262 : index
    %37 = vector.load %arg6[%c0_37, %c262] : memref<8x400xf32, #tpu.memory_space<vmem>>, vector<8x16xf32>
    tpu.vector_store %arg6[%c0_37, %c262], %36 {strides = array<i32>} : memref<8x400xf32, #tpu.memory_space<vmem>>, vector<8x16xf32>,
    %c0_38 = arith.constant 0 : index
    %c0_39 = arith.constant 0 : index
    %c192 = arith.constant 192 : index
    %38 = vector.load %arg1[%c0_38, %c0_39, %c192] : memref<1x8x256xf32, #tpu.memory_space<vmem>>, vector<1x8x16xf32>
    %39 = vector.shape_cast %38 : vector<1x8x16xf32> to vector<8x16xf32>
    %c0_40 = arith.constant 0 : index
    %c282 = arith.constant 282 : index
    %40 = vector.load %arg6[%c0_40, %c282] : memref<8x400xf32, #tpu.memory_space<vmem>>, vector<8x16xf32>
    tpu.vector_store %arg6[%c0_40, %c282], %39 {strides = array<i32>} : memref<8x400xf32, #tpu.memory_space<vmem>>, vector<8x16xf32>,
    %c0_41 = arith.constant 0 : index
    %c0_42 = arith.constant 0 : index
    %c208 = arith.constant 208 : index
    %41 = vector.load %arg1[%c0_41, %c0_42, %c208] : memref<1x8x256xf32, #tpu.memory_space<vmem>>, vector<1x8x16xf32>
    %42 = vector.shape_cast %41 : vector<1x8x16xf32> to vector<8x16xf32>
    %c0_43 = arith.constant 0 : index
    %c302 = arith.constant 302 : index
    %43 = vector.load %arg6[%c0_43, %c302] : memref<8x400xf32, #tpu.memory_space<vmem>>, vector<8x16xf32>
    tpu.vector_store %arg6[%c0_43, %c302], %42 {strides = array<i32>} : memref<8x400xf32, #tpu.memory_space<vmem>>, vector<8x16xf32>,
    %c0_44 = arith.constant 0 : index
    %c0_45 = arith.constant 0 : index
    %c224 = arith.constant 224 : index
    %44 = vector.load %arg1[%c0_44, %c0_45, %c224] : memref<1x8x256xf32, #tpu.memory_space<vmem>>, vector<1x8x16xf32>
    %45 = vector.shape_cast %44 : vector<1x8x16xf32> to vector<8x16xf32>
    %c0_46 = arith.constant 0 : index
    %c322 = arith.constant 322 : index
    %46 = vector.load %arg6[%c0_46, %c322] : memref<8x400xf32, #tpu.memory_space<vmem>>, vector<8x16xf32>
    tpu.vector_store %arg6[%c0_46, %c322], %45 {strides = array<i32>} : memref<8x400xf32, #tpu.memory_space<vmem>>, vector<8x16xf32>,
    %c0_47 = arith.constant 0 : index
    %c0_48 = arith.constant 0 : index
    %c240 = arith.constant 240 : index
    %47 = vector.load %arg1[%c0_47, %c0_48, %c240] : memref<1x8x256xf32, #tpu.memory_space<vmem>>, vector<1x8x16xf32>
    %48 = vector.shape_cast %47 : vector<1x8x16xf32> to vector<8x16xf32>
    %c0_49 = arith.constant 0 : index
    %c342 = arith.constant 342 : index
    %49 = vector.load %arg6[%c0_49, %c342] : memref<8x400xf32, #tpu.memory_space<vmem>>, vector<8x16xf32>
    tpu.vector_store %arg6[%c0_49, %c342], %48 {strides = array<i32>} : memref<8x400xf32, #tpu.memory_space<vmem>>, vector<8x16xf32>,
    %c0_50 = arith.constant 0 : index
    %c0_51 = arith.constant 0 : index
    %50 = vector.load %arg6[%c0_50, %c0_51] : memref<8x400xf32, #tpu.memory_space<vmem>>, vector<8x320xf32>
    %c0_52 = arith.constant 0 : index
    %c0_53 = arith.constant 0 : index
    %51 = vector.load %arg7[%c0_52, %c0_53] : memref<96x320xf32, #tpu.memory_space<vmem>>, vector<8x320xf32>
    tpu.vector_store %arg7[%c0_52, %c0_53], %50 {strides = array<i32>} : memref<96x320xf32, #tpu.memory_space<vmem>>, vector<8x320xf32>,
    %c0_54 = arith.constant 0 : index
    %c1 = arith.constant 1 : index
    %52 = vector.load %arg6[%c0_54, %c1] : memref<8x400xf32, #tpu.memory_space<vmem>>, vector<8x320xf32>
    %c8 = arith.constant 8 : index
    %c0_55 = arith.constant 0 : index
    %53 = vector.load %arg7[%c8, %c0_55] : memref<96x320xf32, #tpu.memory_space<vmem>>, vector<8x320xf32>
    tpu.vector_store %arg7[%c8, %c0_55], %52 {strides = array<i32>} : memref<96x320xf32, #tpu.memory_space<vmem>>, vector<8x320xf32>,
    %c0_56 = arith.constant 0 : index
    %c2 = arith.constant 2 : index
    %54 = vector.load %arg6[%c0_56, %c2] : memref<8x400xf32, #tpu.memory_space<vmem>>, vector<8x320xf32>
    %c16_57 = arith.constant 16 : index
    %c0_58 = arith.constant 0 : index
    %55 = vector.load %arg7[%c16_57, %c0_58] : memref<96x320xf32, #tpu.memory_space<vmem>>, vector<8x320xf32>
    tpu.vector_store %arg7[%c16_57, %c0_58], %54 {strides = array<i32>} : memref<96x320xf32, #tpu.memory_space<vmem>>, vector<8x320xf32>,
    %c0_59 = arith.constant 0 : index
    %c3 = arith.constant 3 : index
    %56 = vector.load %arg6[%c0_59, %c3] : memref<8x400xf32, #tpu.memory_space<vmem>>, vector<8x320xf32>
    %c24 = arith.constant 24 : index
    %c0_60 = arith.constant 0 : index
    %57 = vector.load %arg7[%c24, %c0_60] : memref<96x320xf32, #tpu.memory_space<vmem>>, vector<8x320xf32>
    tpu.vector_store %arg7[%c24, %c0_60], %56 {strides = array<i32>} : memref<96x320xf32, #tpu.memory_space<vmem>>, vector<8x320xf32>,
    %c0_61 = arith.constant 0 : index
    %c4 = arith.constant 4 : index
    %58 = vector.load %arg6[%c0_61, %c4] : memref<8x400xf32, #tpu.memory_space<vmem>>, vector<8x320xf32>
    %c32_62 = arith.constant 32 : index
    %c0_63 = arith.constant 0 : index
    %59 = vector.load %arg7[%c32_62, %c0_63] : memref<96x320xf32, #tpu.memory_space<vmem>>, vector<8x320xf32>
    tpu.vector_store %arg7[%c32_62, %c0_63], %58 {strides = array<i32>} : memref<96x320xf32, #tpu.memory_space<vmem>>, vector<8x320xf32>,
    %c0_64 = arith.constant 0 : index
    %c20 = arith.constant 20 : index
    %60 = vector.load %arg6[%c0_64, %c20] : memref<8x400xf32, #tpu.memory_space<vmem>>, vector<8x320xf32>
    %c40 = arith.constant 40 : index
    %c0_65 = arith.constant 0 : index
    %61 = vector.load %arg7[%c40, %c0_65] : memref<96x320xf32, #tpu.memory_space<vmem>>, vector<8x320xf32>
    tpu.vector_store %arg7[%c40, %c0_65], %60 {strides = array<i32>} : memref<96x320xf32, #tpu.memory_space<vmem>>, vector<8x320xf32>,
    %c0_66 = arith.constant 0 : index
    %c21 = arith.constant 21 : index
    %62 = vector.load %arg6[%c0_66, %c21] : memref<8x400xf32, #tpu.memory_space<vmem>>, vector<8x320xf32>
    %c48_67 = arith.constant 48 : index
    %c0_68 = arith.constant 0 : index
    %63 = vector.load %arg7[%c48_67, %c0_68] : memref<96x320xf32, #tpu.memory_space<vmem>>, vector<8x320xf32>
    tpu.vector_store %arg7[%c48_67, %c0_68], %62 {strides = array<i32>} : memref<96x320xf32, #tpu.memory_space<vmem>>, vector<8x320xf32>,
    %c0_69 = arith.constant 0 : index
    %c22 = arith.constant 22 : index
    %64 = vector.load %arg6[%c0_69, %c22] : memref<8x400xf32, #tpu.memory_space<vmem>>, vector<8x320xf32>
    %c56 = arith.constant 56 : index
    %c0_70 = arith.constant 0 : index
    %65 = vector.load %arg7[%c56, %c0_70] : memref<96x320xf32, #tpu.memory_space<vmem>>, vector<8x320xf32>
    tpu.vector_store %arg7[%c56, %c0_70], %64 {strides = array<i32>} : memref<96x320xf32, #tpu.memory_space<vmem>>, vector<8x320xf32>,
    %c0_71 = arith.constant 0 : index
    %c23 = arith.constant 23 : index
    %66 = vector.load %arg6[%c0_71, %c23] : memref<8x400xf32, #tpu.memory_space<vmem>>, vector<8x320xf32>
    %c64_72 = arith.constant 64 : index
    %c0_73 = arith.constant 0 : index
    %67 = vector.load %arg7[%c64_72, %c0_73] : memref<96x320xf32, #tpu.memory_space<vmem>>, vector<8x320xf32>
    tpu.vector_store %arg7[%c64_72, %c0_73], %66 {strides = array<i32>} : memref<96x320xf32, #tpu.memory_space<vmem>>, vector<8x320xf32>,
    %c0_74 = arith.constant 0 : index
    %c24_75 = arith.constant 24 : index
    %68 = vector.load %arg6[%c0_74, %c24_75] : memref<8x400xf32, #tpu.memory_space<vmem>>, vector<8x320xf32>
    %c72 = arith.constant 72 : index
    %c0_76 = arith.constant 0 : index
    %69 = vector.load %arg7[%c72, %c0_76] : memref<96x320xf32, #tpu.memory_space<vmem>>, vector<8x320xf32>
    tpu.vector_store %arg7[%c72, %c0_76], %68 {strides = array<i32>} : memref<96x320xf32, #tpu.memory_space<vmem>>, vector<8x320xf32>,
    %c0_77 = arith.constant 0 : index
    %c40_78 = arith.constant 40 : index
    %70 = vector.load %arg6[%c0_77, %c40_78] : memref<8x400xf32, #tpu.memory_space<vmem>>, vector<8x320xf32>
    %c80_79 = arith.constant 80 : index
    %c0_80 = arith.constant 0 : index
    %71 = vector.load %arg7[%c80_79, %c0_80] : memref<96x320xf32, #tpu.memory_space<vmem>>, vector<8x320xf32>
    tpu.vector_store %arg7[%c80_79, %c0_80], %70 {strides = array<i32>} : memref<96x320xf32, #tpu.memory_space<vmem>>, vector<8x320xf32>,
    %c0_81 = arith.constant 0 : index
    %c41 = arith.constant 41 : index
    %72 = vector.load %arg6[%c0_81, %c41] : memref<8x400xf32, #tpu.memory_space<vmem>>, vector<8x320xf32>
    %c88 = arith.constant 88 : index
    %c0_82 = arith.constant 0 : index
    %73 = vector.load %arg7[%c88, %c0_82] : memref<96x320xf32, #tpu.memory_space<vmem>>, vector<8x320xf32>
    tpu.vector_store %arg7[%c88, %c0_82], %72 {strides = array<i32>} : memref<96x320xf32, #tpu.memory_space<vmem>>, vector<8x320xf32>,
    %c0_83 = arith.constant 0 : index
    %c0_84 = arith.constant 0 : index
    %74 = vector.load %arg2[%c0_83, %c0_84] : memref<8x96xf32, #tpu.memory_space<vmem>>, vector<8x96xf32>
    %c0_85 = arith.constant 0 : index
    %c0_86 = arith.constant 0 : index
    %75 = vector.load %arg7[%c0_85, %c0_86] : memref<96x320xf32, #tpu.memory_space<vmem>>, vector<96x320xf32>
    %cst_87 = arith.constant dense<0.000000e+00> : vector<8x320xf32>
    %76 = tpu.matmul %74, %75, %cst_87 {dimension_numbers = #tpu.dot_dimension_numbers<[1], [0], [0], [1], [0, 0, 1, 1], [], []>} : vector<8x96xf32>, vector<96x320xf32>, vector<8x320xf32> -> vector<8x320xf32>
    %c0_88 = arith.constant 0 : index
    %c0_89 = arith.constant 0 : index
    %77 = vector.load %arg3[%c0_88, %c0_89] : memref<8x1xf32, #tpu.memory_space<vmem>>, vector<8x1xf32>
    %78 = vector.broadcast %77 : vector<8x1xf32> to vector<8x320xf32>
    %79 = arith.addf %76, %78 : vector<8x320xf32>
    %cst_90 = arith.constant 0.000000e+00 : f32
    %80 = vector.broadcast %cst_90 : f32 to vector<8x320xf32>
    %81 = arith.cmpf ogt, %79, %80 : vector<8x320xf32>
    %c0_91 = arith.constant 0 : index
    %c0_92 = arith.constant 0 : index
    %82 = vector.load %arg4[%c0_91, %c0_92] : memref<8x1xf32, #tpu.memory_space<vmem>>, vector<8x1xf32>
    %83 = vector.broadcast %82 : vector<8x1xf32> to vector<8x320xf32>
    %84 = arith.mulf %83, %79 : vector<8x320xf32>
    %85 = arith.select %81, %79, %84 : vector<8x320xi1>, vector<8x320xf32>
    %86 = vector.extract_strided_slice %85 {offsets = [0, 0], sizes = [8, 16], strides = [1, 1]} : vector<8x320xf32> to vector<8x16xf32>
    %c0_93 = arith.constant 0 : index
    %c0_94 = arith.constant 0 : index
    %c0_95 = arith.constant 0 : index
    %87 = vector.load %arg5[%c0_93, %c0_94, %c0_95] : memref<1x8x256xf32, #tpu.memory_space<vmem>>, vector<1x8x16xf32>
    %88 = vector.shape_cast %87 : vector<1x8x16xf32> to vector<8x16xf32>
    %89 = vector.shape_cast %86 : vector<8x16xf32> to vector<1x8x16xf32>
    tpu.vector_store %arg5[%c0_93, %c0_94, %c0_95], %89 {strides = array<i32>} : memref<1x8x256xf32, #tpu.memory_space<vmem>>, vector<1x8x16xf32>,
    %90 = vector.extract_strided_slice %85 {offsets = [0, 20], sizes = [8, 16], strides = [1, 1]} : vector<8x320xf32> to vector<8x16xf32>
    %c0_96 = arith.constant 0 : index
    %c0_97 = arith.constant 0 : index
    %c16_98 = arith.constant 16 : index
    %91 = vector.load %arg5[%c0_96, %c0_97, %c16_98] : memref<1x8x256xf32, #tpu.memory_space<vmem>>, vector<1x8x16xf32>
    %92 = vector.shape_cast %91 : vector<1x8x16xf32> to vector<8x16xf32>
    %93 = vector.shape_cast %90 : vector<8x16xf32> to vector<1x8x16xf32>
    tpu.vector_store %arg5[%c0_96, %c0_97, %c16_98], %93 {strides = array<i32>} : memref<1x8x256xf32, #tpu.memory_space<vmem>>, vector<1x8x16xf32>,
    %94 = vector.extract_strided_slice %85 {offsets = [0, 40], sizes = [8, 16], strides = [1, 1]} : vector<8x320xf32> to vector<8x16xf32>
    %c0_99 = arith.constant 0 : index
    %c0_100 = arith.constant 0 : index
    %c32_101 = arith.constant 32 : index
    %95 = vector.load %arg5[%c0_99, %c0_100, %c32_101] : memref<1x8x256xf32, #tpu.memory_space<vmem>>, vector<1x8x16xf32>
    %96 = vector.shape_cast %95 : vector<1x8x16xf32> to vector<8x16xf32>
    %97 = vector.shape_cast %94 : vector<8x16xf32> to vector<1x8x16xf32>
    tpu.vector_store %arg5[%c0_99, %c0_100, %c32_101], %97 {strides = array<i32>} : memref<1x8x256xf32, #tpu.memory_space<vmem>>, vector<1x8x16xf32>,
    %98 = vector.extract_strided_slice %85 {offsets = [0, 60], sizes = [8, 16], strides = [1, 1]} : vector<8x320xf32> to vector<8x16xf32>
    %c0_102 = arith.constant 0 : index
    %c0_103 = arith.constant 0 : index
    %c48_104 = arith.constant 48 : index
    %99 = vector.load %arg5[%c0_102, %c0_103, %c48_104] : memref<1x8x256xf32, #tpu.memory_space<vmem>>, vector<1x8x16xf32>
    %100 = vector.shape_cast %99 : vector<1x8x16xf32> to vector<8x16xf32>
    %101 = vector.shape_cast %98 : vector<8x16xf32> to vector<1x8x16xf32>
    tpu.vector_store %arg5[%c0_102, %c0_103, %c48_104], %101 {strides = array<i32>} : memref<1x8x256xf32, #tpu.memory_space<vmem>>, vector<1x8x16xf32>,
    %102 = vector.extract_strided_slice %85 {offsets = [0, 80], sizes = [8, 16], strides = [1, 1]} : vector<8x320xf32> to vector<8x16xf32>
    %c0_105 = arith.constant 0 : index
    %c0_106 = arith.constant 0 : index
    %c64_107 = arith.constant 64 : index
    %103 = vector.load %arg5[%c0_105, %c0_106, %c64_107] : memref<1x8x256xf32, #tpu.memory_space<vmem>>, vector<1x8x16xf32>
    %104 = vector.shape_cast %103 : vector<1x8x16xf32> to vector<8x16xf32>
    %105 = vector.shape_cast %102 : vector<8x16xf32> to vector<1x8x16xf32>
    tpu.vector_store %arg5[%c0_105, %c0_106, %c64_107], %105 {strides = array<i32>} : memref<1x8x256xf32, #tpu.memory_space<vmem>>, vector<1x8x16xf32>,
    %106 = vector.extract_strided_slice %85 {offsets = [0, 100], sizes = [8, 16], strides = [1, 1]} : vector<8x320xf32> to vector<8x16xf32>
    %c0_108 = arith.constant 0 : index
    %c0_109 = arith.constant 0 : index
    %c80_110 = arith.constant 80 : index
    %107 = vector.load %arg5[%c0_108, %c0_109, %c80_110] : memref<1x8x256xf32, #tpu.memory_space<vmem>>, vector<1x8x16xf32>
    %108 = vector.shape_cast %107 : vector<1x8x16xf32> to vector<8x16xf32>
    %109 = vector.shape_cast %106 : vector<8x16xf32> to vector<1x8x16xf32>
    tpu.vector_store %arg5[%c0_108, %c0_109, %c80_110], %109 {strides = array<i32>} : memref<1x8x256xf32, #tpu.memory_space<vmem>>, vector<1x8x16xf32>,
    %110 = vector.extract_strided_slice %85 {offsets = [0, 120], sizes = [8, 16], strides = [1, 1]} : vector<8x320xf32> to vector<8x16xf32>
    %c0_111 = arith.constant 0 : index
    %c0_112 = arith.constant 0 : index
    %c96_113 = arith.constant 96 : index
    %111 = vector.load %arg5[%c0_111, %c0_112, %c96_113] : memref<1x8x256xf32, #tpu.memory_space<vmem>>, vector<1x8x16xf32>
    %112 = vector.shape_cast %111 : vector<1x8x16xf32> to vector<8x16xf32>
    %113 = vector.shape_cast %110 : vector<8x16xf32> to vector<1x8x16xf32>
    tpu.vector_store %arg5[%c0_111, %c0_112, %c96_113], %113 {strides = array<i32>} : memref<1x8x256xf32, #tpu.memory_space<vmem>>, vector<1x8x16xf32>,
    %114 = vector.extract_strided_slice %85 {offsets = [0, 140], sizes = [8, 16], strides = [1, 1]} : vector<8x320xf32> to vector<8x16xf32>
    %c0_114 = arith.constant 0 : index
    %c0_115 = arith.constant 0 : index
    %c112_116 = arith.constant 112 : index
    %115 = vector.load %arg5[%c0_114, %c0_115, %c112_116] : memref<1x8x256xf32, #tpu.memory_space<vmem>>, vector<1x8x16xf32>
    %116 = vector.shape_cast %115 : vector<1x8x16xf32> to vector<8x16xf32>
    %117 = vector.shape_cast %114 : vector<8x16xf32> to vector<1x8x16xf32>
    tpu.vector_store %arg5[%c0_114, %c0_115, %c112_116], %117 {strides = array<i32>} : memref<1x8x256xf32, #tpu.memory_space<vmem>>, vector<1x8x16xf32>,
    %118 = vector.extract_strided_slice %85 {offsets = [0, 160], sizes = [8, 16], strides = [1, 1]} : vector<8x320xf32> to vector<8x16xf32>
    %c0_117 = arith.constant 0 : index
    %c0_118 = arith.constant 0 : index
    %c128_119 = arith.constant 128 : index
    %119 = vector.load %arg5[%c0_117, %c0_118, %c128_119] : memref<1x8x256xf32, #tpu.memory_space<vmem>>, vector<1x8x16xf32>
    %120 = vector.shape_cast %119 : vector<1x8x16xf32> to vector<8x16xf32>
    %121 = vector.shape_cast %118 : vector<8x16xf32> to vector<1x8x16xf32>
    tpu.vector_store %arg5[%c0_117, %c0_118, %c128_119], %121 {strides = array<i32>} : memref<1x8x256xf32, #tpu.memory_space<vmem>>, vector<1x8x16xf32>,
    %122 = vector.extract_strided_slice %85 {offsets = [0, 180], sizes = [8, 16], strides = [1, 1]} : vector<8x320xf32> to vector<8x16xf32>
    %c0_120 = arith.constant 0 : index
    %c0_121 = arith.constant 0 : index
    %c144_122 = arith.constant 144 : index
    %123 = vector.load %arg5[%c0_120, %c0_121, %c144_122] : memref<1x8x256xf32, #tpu.memory_space<vmem>>, vector<1x8x16xf32>
    %124 = vector.shape_cast %123 : vector<1x8x16xf32> to vector<8x16xf32>
    %125 = vector.shape_cast %122 : vector<8x16xf32> to vector<1x8x16xf32>
    tpu.vector_store %arg5[%c0_120, %c0_121, %c144_122], %125 {strides = array<i32>} : memref<1x8x256xf32, #tpu.memory_space<vmem>>, vector<1x8x16xf32>,
    %126 = vector.extract_strided_slice %85 {offsets = [0, 200], sizes = [8, 16], strides = [1, 1]} : vector<8x320xf32> to vector<8x16xf32>
    %c0_123 = arith.constant 0 : index
    %c0_124 = arith.constant 0 : index
    %c160_125 = arith.constant 160 : index
    %127 = vector.load %arg5[%c0_123, %c0_124, %c160_125] : memref<1x8x256xf32, #tpu.memory_space<vmem>>, vector<1x8x16xf32>
    %128 = vector.shape_cast %127 : vector<1x8x16xf32> to vector<8x16xf32>
    %129 = vector.shape_cast %126 : vector<8x16xf32> to vector<1x8x16xf32>
    tpu.vector_store %arg5[%c0_123, %c0_124, %c160_125], %129 {strides = array<i32>} : memref<1x8x256xf32, #tpu.memory_space<vmem>>, vector<1x8x16xf32>,
    %130 = vector.extract_strided_slice %85 {offsets = [0, 220], sizes = [8, 16], strides = [1, 1]} : vector<8x320xf32> to vector<8x16xf32>
    %c0_126 = arith.constant 0 : index
    %c0_127 = arith.constant 0 : index
    %c176_128 = arith.constant 176 : index
    %131 = vector.load %arg5[%c0_126, %c0_127, %c176_128] : memref<1x8x256xf32, #tpu.memory_space<vmem>>, vector<1x8x16xf32>
    %132 = vector.shape_cast %131 : vector<1x8x16xf32> to vector<8x16xf32>
    %133 = vector.shape_cast %130 : vector<8x16xf32> to vector<1x8x16xf32>
    tpu.vector_store %arg5[%c0_126, %c0_127, %c176_128], %133 {strides = array<i32>} : memref<1x8x256xf32, #tpu.memory_space<vmem>>, vector<1x8x16xf32>,
    %134 = vector.extract_strided_slice %85 {offsets = [0, 240], sizes = [8, 16], strides = [1, 1]} : vector<8x320xf32> to vector<8x16xf32>
    %c0_129 = arith.constant 0 : index
    %c0_130 = arith.constant 0 : index
    %c192_131 = arith.constant 192 : index
    %135 = vector.load %arg5[%c0_129, %c0_130, %c192_131] : memref<1x8x256xf32, #tpu.memory_space<vmem>>, vector<1x8x16xf32>
    %136 = vector.shape_cast %135 : vector<1x8x16xf32> to vector<8x16xf32>
    %137 = vector.shape_cast %134 : vector<8x16xf32> to vector<1x8x16xf32>
    tpu.vector_store %arg5[%c0_129, %c0_130, %c192_131], %137 {strides = array<i32>} : memref<1x8x256xf32, #tpu.memory_space<vmem>>, vector<1x8x16xf32>,
    %138 = vector.extract_strided_slice %85 {offsets = [0, 260], sizes = [8, 16], strides = [1, 1]} : vector<8x320xf32> to vector<8x16xf32>
    %c0_132 = arith.constant 0 : index
    %c0_133 = arith.constant 0 : index
    %c208_134 = arith.constant 208 : index
    %139 = vector.load %arg5[%c0_132, %c0_133, %c208_134] : memref<1x8x256xf32, #tpu.memory_space<vmem>>, vector<1x8x16xf32>
    %140 = vector.shape_cast %139 : vector<1x8x16xf32> to vector<8x16xf32>
    %141 = vector.shape_cast %138 : vector<8x16xf32> to vector<1x8x16xf32>
    tpu.vector_store %arg5[%c0_132, %c0_133, %c208_134], %141 {strides = array<i32>} : memref<1x8x256xf32, #tpu.memory_space<vmem>>, vector<1x8x16xf32>,
    %142 = vector.extract_strided_slice %85 {offsets = [0, 280], sizes = [8, 16], strides = [1, 1]} : vector<8x320xf32> to vector<8x16xf32>
    %c0_135 = arith.constant 0 : index
    %c0_136 = arith.constant 0 : index
    %c224_137 = arith.constant 224 : index
    %143 = vector.load %arg5[%c0_135, %c0_136, %c224_137] : memref<1x8x256xf32, #tpu.memory_space<vmem>>, vector<1x8x16xf32>
    %144 = vector.shape_cast %143 : vector<1x8x16xf32> to vector<8x16xf32>
    %145 = vector.shape_cast %142 : vector<8x16xf32> to vector<1x8x16xf32>
    tpu.vector_store %arg5[%c0_135, %c0_136, %c224_137], %145 {strides = array<i32>} : memref<1x8x256xf32, #tpu.memory_space<vmem>>, vector<1x8x16xf32>,
    %146 = vector.extract_strided_slice %85 {offsets = [0, 300], sizes = [8, 16], strides = [1, 1]} : vector<8x320xf32> to vector<8x16xf32>
    %c0_138 = arith.constant 0 : index
    %c0_139 = arith.constant 0 : index
    %c240_140 = arith.constant 240 : index
    %147 = vector.load %arg5[%c0_138, %c0_139, %c240_140] : memref<1x8x256xf32, #tpu.memory_space<vmem>>, vector<1x8x16xf32>
    %148 = vector.shape_cast %147 : vector<1x8x16xf32> to vector<8x16xf32>
    %149 = vector.shape_cast %146 : vector<8x16xf32> to vector<1x8x16xf32>
    tpu.vector_store %arg5[%c0_138, %c0_139, %c240_140], %149 {strides = array<i32>} : memref<1x8x256xf32, #tpu.memory_space<vmem>>, vector<1x8x16xf32>,
    return
  }
  func.func @transform_0(%arg0: i32) -> (i32, i32, i32) {
    %c0_i32 = arith.constant 0 : i32
    %c0_i32_0 = arith.constant 0 : i32
    %c0_i32_1 = arith.constant 0 : i32
    return %arg0, %c0_i32, %c0_i32_0 : i32, i32, i32
  }
  func.func @transform_1(%arg0: i32) -> (i32, i32) {
    %c0_i32 = arith.constant 0 : i32
    %c0_i32_0 = arith.constant 0 : i32
    %c0_i32_1 = arith.constant 0 : i32
    return %c0_i32, %c0_i32_0 : i32, i32
  }
  func.func @transform_2(%arg0: i32) -> (i32, i32) {
    %c0_i32 = arith.constant 0 : i32
    %c0_i32_0 = arith.constant 0 : i32
    %c0_i32_1 = arith.constant 0 : i32
    return %c0_i32, %c0_i32_0 : i32, i32
  }
  func.func @transform_3(%arg0: i32) -> (i32, i32) {
    %c0_i32 = arith.constant 0 : i32
    %c0_i32_0 = arith.constant 0 : i32
    %c0_i32_1 = arith.constant 0 : i32
    return %c0_i32, %c0_i32_0 : i32, i32
  }
  func.func @transform_4(%arg0: i32) -> (i32, i32, i32) {
    %c0_i32 = arith.constant 0 : i32
    %c0_i32_0 = arith.constant 0 : i32
    %c0_i32_1 = arith.constant 0 : i32
    return %arg0, %c0_i32, %c0_i32_0 : i32, i32, i32
  }
}

</mosaic_0001>

<llo_original>
// kernel: entropy_conv_forward.1
$region0: #{entropy_conv_forward.1}
  #allocation0 [shape = 'u32[]', space=smem, size = 0x4, offset = 0x4, fixed_abs, tag = 'smem constant byte address 0x4 - core index']
  #allocation1 [shape = 'u32[72,128]{1,0:T(1,128)}', space=vmem, size = 0x9000, scoped, tag = 'internal scratch']
  #allocation2 [shape = 'f32[8,400]{1,0:T(8,128)}', space=vmem, size = 0x4000, scoped, tag = 'scratch operand']
  #allocation3 [shape = 'f32[96,320]{1,0:T(8,128)}', space=vmem, size = 0x24000, scoped, tag = 'scratch operand']
  %s0 = inlined_call_operand.vmem [shape: f32[2,8,256], index: 0, kind: input, shape index: {}]
  %s1 = inlined_call_operand.vmem [shape: f32[8,96], index: 1, kind: input, shape index: {}]
  %s2 = inlined_call_operand.vmem [shape: f32[8,1], index: 2, kind: input, shape index: {}]
  %s3 = inlined_call_operand.vmem [shape: f32[8,1], index: 3, kind: input, shape index: {}]
  %s4 = inlined_call_operand.vmem [shape: f32[2,8,256], index: 4, kind: output, shape index: {}]
  %s5 = sld [smem:[#allocation0]]
  $region49: #{entropy_conv_forward.1} parent=0
    _
  %s7 = ssub.s32 1, %s5
  %s8 = scalar_select 0, %s7, %s5
  loop: start=0, step=1, limit=4
  $region2: #{entropy_conv_forward.1} parent=0 // loop_pre_header
    _
  $region3: #{entropy_conv_forward.1} parent=0 // loop_header
    %s10 = sphi 0, %s14
    %p11 = scmp.ge.s32.totalorder %s10, 4
    %s20 = sphi 0, %s22
    %s23 = sphi 0, %s20
    %s24 = sphi 0, %s23
    %s40 = sphi 0, %s24
    %s44 = sphi 0, %s44
    %s46 = sphi 0, %s44
    %s47 = sphi 0, %s46
    %s61 = sphi 0, %s47
    %s65 = sphi 0, %s65
    %s67 = sphi 0, %s65
    %s68 = sphi 0, %s67
    %s82 = sphi 0, %s68
    %s86 = sphi 0, %s86
    %s88 = sphi 0, %s86
    %s89 = sphi 0, %s88
    %s103 = sphi 0, %s89
    %s109 = sphi 0, %s111
    %s112 = sphi 0, %s109
    %s113 = sphi 0, %s112
    %s129 = sphi 0, %s113
  $region4: #{entropy_conv_forward.1} parent=0 // loop_header_branch
    %13 = sbr.rel (%p11) target = $region8
  $region5: #{entropy_conv_forward.1} parent=0 // loop_body
    %s15 = ssub.s32 %s10, 1
    %s16 = ssub.s32 %s10, 2
    %s17 = sadd.s32 %s10, 1
    %s18 = ssub.s32 %s10, %s17
    %p19 = scmp.eq.s32.totalorder %s18, 0
    %s21 = sadd.s32 %s20, 1
    %s22 = scalar_select %p19, %s20, %s21
    %p25 = pneg %p19
    %p26 = scmp.eq.s32.totalorder %s10, 1
    %p27 = por %p25, %p26
    %p28 = scmp.ne.s32.totalorder %s20, %s23
    %p29 = scmp.eq.s32.totalorder %s10, 0
    %p30 = por %p28, %p29
    %p31 = scmp.ne.s32.totalorder %s20, %s23
    %p32 = scmp.eq.s32.totalorder %s15, 1
    %p33 = por %p31, %p32
    %p34 = scmp.ne.s32.totalorder %s23, %s24
    %p35 = scmp.eq.s32.totalorder %s15, 0
    %p36 = por %p34, %p35
    %p37 = scmp.ne.s32.totalorder %s23, %s24
    %p38 = scmp.eq.s32.totalorder %s16, 1
    %p39 = por %p37, %p38
    %p41 = scmp.ne.s32.totalorder %s24, %s40
    %p42 = scmp.eq.s32.totalorder %s16, 0
    %p43 = por %p41, %p42
    %s45 = sadd.s32 %s44, 1
    %p48 = scmp.eq.s32.totalorder %s10, 1
    %p49 = scmp.ne.s32.totalorder %s44, %s46
    %p50 = scmp.eq.s32.totalorder %s10, 0
    %p51 = por %p49, %p50
    %p52 = scmp.ne.s32.totalorder %s44, %s46
    %p53 = scmp.eq.s32.totalorder %s15, 1
    %p54 = por %p52, %p53
    %p55 = scmp.ne.s32.totalorder %s46, %s47
    %p56 = scmp.eq.s32.totalorder %s15, 0
    %p57 = por %p55, %p56
    %p58 = scmp.ne.s32.totalorder %s46, %s47
    %p59 = scmp.eq.s32.totalorder %s16, 1
    %p60 = por %p58, %p59
    %p62 = scmp.ne.s32.totalorder %s47, %s61
    %p63 = scmp.eq.s32.totalorder %s16, 0
    %p64 = por %p62, %p63
    %s66 = sadd.s32 %s65, 1
    %p69 = scmp.eq.s32.totalorder %s10, 1
    %p70 = scmp.ne.s32.totalorder %s65, %s67
    %p71 = scmp.eq.s32.totalorder %s10, 0
    %p72 = por %p70, %p71
    %p73 = scmp.ne.s32.totalorder %s65, %s67
    %p74 = scmp.eq.s32.totalorder %s15, 1
    %p75 = por %p73, %p74
    %p76 = scmp.ne.s32.totalorder %s67, %s68
    %p77 = scmp.eq.s32.totalorder %s15, 0
    %p78 = por %p76, %p77
    %p79 = scmp.ne.s32.totalorder %s67, %s68
    %p80 = scmp.eq.s32.totalorder %s16, 1
    %p81 = por %p79, %p80
    %p83 = scmp.ne.s32.totalorder %s68, %s82
    %p84 = scmp.eq.s32.totalorder %s16, 0
    %p85 = por %p83, %p84
    %s87 = sadd.s32 %s86, 1
    %p90 = scmp.eq.s32.totalorder %s10, 1
    %p91 = scmp.ne.s32.totalorder %s86, %s88
    %p92 = scmp.eq.s32.totalorder %s10, 0
    %p93 = por %p91, %p92
    %p94 = scmp.ne.s32.totalorder %s86, %s88
    %p95 = scmp.eq.s32.totalorder %s15, 1
    %p96 = por %p94, %p95
    %p97 = scmp.ne.s32.totalorder %s88, %s89
    %p98 = scmp.eq.s32.totalorder %s15, 0
    %p99 = por %p97, %p98
    %p100 = scmp.ne.s32.totalorder %s88, %s89
    %p101 = scmp.eq.s32.totalorder %s16, 1
    %p102 = por %p100, %p101
    %p104 = scmp.ne.s32.totalorder %s89, %s103
    %p105 = scmp.eq.s32.totalorder %s16, 0
    %p106 = por %p104, %p105
    %s107 = ssub.s32 %s10, %s17
    %p108 = scmp.eq.s32.totalorder %s107, 0
    %s110 = sadd.s32 %s109, 1
    %s111 = scalar_select %p108, %s109, %s110
    %p114 = pneg %p108
    %p115 = scmp.eq.s32.totalorder %s10, 1
    %p116 = por %p114, %p115
    %p117 = scmp.ne.s32.totalorder %s109, %s112
    %p118 = scmp.eq.s32.totalorder %s10, 0
    %p119 = por %p117, %p118
    %p120 = scmp.ne.s32.totalorder %s109, %s112
    %p121 = scmp.eq.s32.totalorder %s15, 1
    %p122 = por %p120, %p121
    %p123 = scmp.ne.s32.totalorder %s112, %s113
    %p124 = scmp.eq.s32.totalorder %s15, 0
    %p125 = por %p123, %p124
    %p126 = scmp.ne.s32.totalorder %s112, %s113
    %p127 = scmp.eq.s32.totalorder %s16, 1
    %p128 = por %p126, %p127
    %p130 = scmp.ne.s32.totalorder %s113, %s129
    %p131 = scmp.eq.s32.totalorder %s16, 0
    %p132 = por %p130, %p131
    %p133 = scmp.le.s32.totalorder 1, %s10
    %p134 = scmp.lt.s32.totalorder %s10, 3
    %p135 = pnand %p133, %p134
    %p136 = pneg %p135
    // Predicated region
    $region9: #{entropy_conv_forward.1} parent=5 // pred_check
      _
    $region10: #{entropy_conv_forward.1} parent=5 // pred_check_branch
      %138 = sbr.rel (%p135) target = $region12
    $region11: #{entropy_conv_forward.1} parent=5 // pred_region
      %s139 = ssub.s32 %s10, 1
      // Predicated region
      $region13: #{entropy_conv_forward.1} parent=11 // pred_check
        %p140 = pneg %p57
      $region14: #{entropy_conv_forward.1} parent=11 // pred_check_branch
        %142 = sbr.rel (%p140) target = $region16
      $region15: #{entropy_conv_forward.1} parent=11 // pred_region
        _
      $region16: #{entropy_conv_forward.1} parent=11 // pred_fallthru
        _
      // Predicated region
      $region17: #{entropy_conv_forward.1} parent=11 // pred_check
        %p143 = pneg %p78
      $region18: #{entropy_conv_forward.1} parent=11 // pred_check_branch
        %145 = sbr.rel (%p143) target = $region20
      $region19: #{entropy_conv_forward.1} parent=11 // pred_region
        _
      $region20: #{entropy_conv_forward.1} parent=11 // pred_fallthru
        _
      // Predicated region
      $region21: #{entropy_conv_forward.1} parent=11 // pred_check
        %p146 = pneg %p99
      $region22: #{entropy_conv_forward.1} parent=11 // pred_check_branch
        %148 = sbr.rel (%p146) target = $region24
      $region23: #{entropy_conv_forward.1} parent=11 // pred_region
        _
      $region24: #{entropy_conv_forward.1} parent=11 // pred_fallthru
        _
    $region12: #{entropy_conv_forward.1} parent=5 // pred_fallthru
      _
    %p149 = scmp.lt.s32.totalorder %s10, 2
    // Predicated region
    $region25: #{entropy_conv_forward.1} parent=5 // pred_check
      %p150 = pneg %p149
    $region26: #{entropy_conv_forward.1} parent=5 // pred_check_branch
      %152 = sbr.rel (%p150) target = $region28
    $region27: #{entropy_conv_forward.1} parent=5 // pred_region
      // Predicated region
      $region29: #{entropy_conv_forward.1} parent=27 // pred_check
        %p153 = pneg %p30
      $region30: #{entropy_conv_forward.1} parent=27 // pred_check_branch
        %155 = sbr.rel (%p153) target = $region32
      $region31: #{entropy_conv_forward.1} parent=27 // pred_region
        %p156 = scmp.lt.s32.totalorder %s10, 1
        %s157 = scalar_select %p156, %s10, 1
        %s158 = smul.addr %s157, 2
        %s159 = smul.addr %s158, 8
        %s160 = scalar_lea.vmem %s0, %s159
      $region32: #{entropy_conv_forward.1} parent=27 // pred_fallthru
        _
    $region28: #{entropy_conv_forward.1} parent=5 // pred_fallthru
      _
    %p161 = scmp.le.s32.totalorder 1, %s10
    %p162 = scmp.lt.s32.totalorder %s10, 3
    %p163 = pnand %p161, %p162
    %p164 = pneg %p163
    // Predicated region
    $region33: #{entropy_conv_forward.1} parent=5 // pred_check
      _
    $region34: #{entropy_conv_forward.1} parent=5 // pred_check_branch
      %166 = sbr.rel (%p163) target = $region36
    $region35: #{entropy_conv_forward.1} parent=5 // pred_region
      %s167 = ssub.s32 %s10, 1
      %p168 = scmp.lt.s32.totalorder %s15, 1
      %s169 = scalar_select %p168, %s15, 1
      %s170 = smul.addr %s169, 2
      %s171 = smul.addr %s170, 8
      %s172 = scalar_lea.vmem %s0, %s171
      %p173 = pneg %p36
      %p174 = pneg %p33
      %p175 = pneg %p57
      %p176 = pneg %p54
      %p177 = pneg %p78
      %p178 = pneg %p75
      %p179 = pneg %p99
      %p180 = pneg %p96
      %p181 = pneg %p125
      %p182 = pneg %p122
      %p183 = scmp.lt.s32.totalorder %s15, 1
      %s184 = scalar_select %p183, %s15, 1
      %s185 = smul.addr %s184, 2
      %s186 = smul.addr %s185, 8
      %s187 = scalar_lea.vmem %s4, %s186
      %p188 = scmp.lt.s32.totalorder %s15, 1
      %s189 = scalar_select %p188, %s15, 1
      %s190 = smul.addr %s189, 2
      %s191 = smul.addr %s190, 8
      %s192 = scalar_lea.vmem %s0, %s191
      %p193 = scmp.lt.s32.totalorder %s15, 1
      %s194 = scalar_select %p193, %s15, 1
      %s195 = smul.addr %s194, 2
      %s196 = smul.addr %s195, 8
      %s197 = scalar_lea.vmem %s4, %s196
      %198 = vst [vmem:[#allocation2] sm:$0xff] 0.0
      %199 = vst [vmem:[#allocation2 + $0x8] sm:$0xff] 0.0
      %200 = vst [vmem:[#allocation2 + $0x10] sm:$0xff] 0.0
      %vm201 = vcmask 130048
      %202 = vst.msk [vmem:[#allocation2 + $0x18] sm:$0xff] %vm201, 0.0
      %v203 = vld [vmem:[%s192] sm:$0xff]
      %205 = vrot.lane.b32.xlu0 %v203, 42
      %v206 = vpop.permute.xlu0 %205
      %vm208 = vcmask 474448
      %209 = vst.msk [vmem:[#allocation2] sm:$0xff] %vm208, %v206
      %v210 = vld [vmem:[%s192] sm:$0xff]
      %212 = vrot.lane.b32.xlu0 %v210, 46
      %v213 = vpop.permute.xlu0 %212
      %vm215 = vcmask 638448
      %216 = vst.msk [vmem:[#allocation2] sm:$0xff] %vm215, %v213
      %v217 = vld [vmem:[%s192] sm:$0xff]
      %219 = vrot.lane.b32.xlu0 %v217, 50
      %v220 = vpop.permute.xlu0 %219
      %vm222 = vcmask 802448
      %223 = vst.msk [vmem:[#allocation2] sm:$0xff] %vm222, %v220
      %v224 = vld [vmem:[%s192] sm:$0xff]
      %226 = vrot.lane.b32.xlu0 %v224, 54
      %v227 = vpop.permute.xlu0 %226
      %vm229 = vcmask 966448
      %230 = vst.msk [vmem:[#allocation2] sm:$0xff] %vm229, %v227
      %v231 = vld [vmem:[%s192] sm:$0xff]
      %233 = vrot.lane.b32.xlu0 %v231, 58
      %v234 = vpop.permute.xlu0 %233
      %vm236 = vcmask 1048528
      %237 = vst.msk [vmem:[#allocation2] sm:$0xff] %vm236, %v234
      %vm238 = vcmask 80896
      %239 = vst.msk [vmem:[#allocation2 + $0x8] sm:$0xff] %vm238, %v234
      %v240 = vld [vmem:[%s192] sm:$0xff]
      %242 = vrot.lane.b32.xlu0 %v240, 62
      %v243 = vpop.permute.xlu0 %242
      %vm245 = vcmask 244848
      %246 = vst.msk [vmem:[#allocation2 + $0x8] sm:$0xff] %vm245, %v243
      %v247 = vld [vmem:[%s192] sm:$0xff]
      %249 = vrot.lane.b32.xlu0 %v247, 66
      %v250 = vpop.permute.xlu0 %249
      %vm252 = vcmask 408848
      %253 = vst.msk [vmem:[#allocation2 + $0x8] sm:$0xff] %vm252, %v250
      %v254 = vld [vmem:[%s192] sm:$0xff]
      %256 = vrot.lane.b32.xlu0 %v254, 70
      %v257 = vpop.permute.xlu0 %256
      %vm259 = vcmask 572848
      %260 = vst.msk [vmem:[#allocation2 + $0x8] sm:$0xff] %vm259, %v257
      %v261 = vld [vmem:[%s192 + $0x8] sm:$0xff]
      %263 = vrot.lane.b32.xlu0 %v261, 74
      %v264 = vpop.permute.xlu0 %263
      %vm266 = vcmask 736848
      %267 = vst.msk [vmem:[#allocation2 + $0x8] sm:$0xff] %vm266, %v264
      %v268 = vld [vmem:[%s192 + $0x8] sm:$0xff]
      %270 = vrot.lane.b32.xlu0 %v268, 78
      %v271 = vpop.permute.xlu0 %270
      %vm273 = vcmask 900848
      %274 = vst.msk [vmem:[#allocation2 + $0x8] sm:$0xff] %vm273, %v271
      %v275 = vld [vmem:[%s192 + $0x8] sm:$0xff]
      %277 = vrot.lane.b32.xlu0 %v275, 82
      %v278 = vpop.permute.xlu0 %277
      %vm280 = vcmask 1048464
      %281 = vst.msk [vmem:[#allocation2 + $0x8] sm:$0xff] %vm280, %v278
      %vm282 = vcmask 15360
      %283 = vst.msk [vmem:[#allocation2 + $0x10] sm:$0xff] %vm282, %v278
      %v284 = vld [vmem:[%s192 + $0x8] sm:$0xff]
      %286 = vrot.lane.b32.xlu0 %v284, 86
      %v287 = vpop.permute.xlu0 %286
      %vm289 = vcmask 179248
      %290 = vst.msk [vmem:[#allocation2 + $0x10] sm:$0xff] %vm289, %v287
      %v291 = vld [vmem:[%s192 + $0x8] sm:$0xff]
      %293 = vrot.lane.b32.xlu0 %v291, 90
      %v294 = vpop.permute.xlu0 %293
      %vm296 = vcmask 343248
      %297 = vst.msk [vmem:[#allocation2 + $0x10] sm:$0xff] %vm296, %v294
      %v298 = vld [vmem:[%s192 + $0x8] sm:$0xff]
      %300 = vrot.lane.b32.xlu0 %v298, 94
      %v301 = vpop.permute.xlu0 %300
      %vm303 = vcmask 507248
      %304 = vst.msk [vmem:[#allocation2 + $0x10] sm:$0xff] %vm303, %v301
      %v305 = vld [vmem:[%s192 + $0x8] sm:$0xff]
      %307 = vrot.lane.b32.xlu0 %v305, 98
      %v308 = vpop.permute.xlu0 %307
      %vm310 = vcmask 671248
      %311 = vst.msk [vmem:[#allocation2 + $0x10] sm:$0xff] %vm310, %v308
      %v312 = vld [vmem:[%s192 + $0x8] sm:$0xff]
      %314 = vrot.lane.b32.xlu0 %v312, 102
      %v315 = vpop.permute.xlu0 %314
      %vm317 = vcmask 835248
      %318 = vst.msk [vmem:[#allocation2 + $0x10] sm:$0xff] %vm317, %v315
      %v319 = vld [vmem:[#allocation2] sm:$0xff]
      %v320 = vld [vmem:[#allocation2 + $0x8] sm:$0xff]
      %v321 = vld [vmem:[#allocation2 + $0x10] sm:$0xff]
      %322 = vst [vmem:[#allocation3] sm:$0xff] %v319
      %323 = vst [vmem:[#allocation3 + $0x8] sm:$0xff] %v320
      %vm324 = vcmask 523264
      %325 = vst.msk [vmem:[#allocation3 + $0x10] sm:$0xff] %vm324, %v321
      %v326 = vld [vmem:[#allocation2] sm:$0xff]
      %v327 = vld [vmem:[#allocation2 + $0x8] sm:$0xff]
      %v328 = vld [vmem:[#allocation2 + $0x10] sm:$0xff]
      %332 = vrot.lane.b32.xlu0 %v326, 127
      %v333 = vpop.permute.xlu0 %332
      %334 = vrot.lane.b32.xlu0 %v327, 127
      %v335 = vpop.permute.xlu0 %334
      %336 = vrot.lane.b32.xlu0 %v328, 127
      %v337 = vpop.permute.xlu0 %336
      %vm338 = vcmask 1039360
      %v339 = vsel %vm338, %v333, %v335
      %v340 = vsel %vm338, %v335, %v337
      %344 = vst [vmem:[#allocation3 + $0x18] sm:$0xff] %v339
      %345 = vst [vmem:[#allocation3 + $0x20] sm:$0xff] %v340
      %346 = vst.msk [vmem:[#allocation3 + $0x28] sm:$0xff] %vm324, %v337
      %v347 = vld [vmem:[#allocation2] sm:$0xff]
      %v348 = vld [vmem:[#allocation2 + $0x8] sm:$0xff]
      %v349 = vld [vmem:[#allocation2 + $0x10] sm:$0xff]
      %353 = vrot.lane.b32.xlu0 %v347, 126
      %v354 = vpop.permute.xlu0 %353
      %355 = vrot.lane.b32.xlu0 %v348, 126
      %v356 = vpop.permute.xlu0 %355
      %357 = vrot.lane.b32.xlu0 %v349, 126
      %v358 = vpop.permute.xlu0 %357
      %vm359 = vcmask 1031168
      %v360 = vsel %vm359, %v354, %v356
      %v361 = vsel %vm359, %v356, %v358
      %365 = vst [vmem:[#allocation3 + $0x30] sm:$0xff] %v360
      %366 = vst [vmem:[#allocation3 + $0x38] sm:$0xff] %v361
      %367 = vst.msk [vmem:[#allocation3 + $0x40] sm:$0xff] %vm324, %v358
      %v368 = vld [vmem:[#allocation2] sm:$0xff]
      %v369 = vld [vmem:[#allocation2 + $0x8] sm:$0xff]
      %v370 = vld [vmem:[#allocation2 + $0x10] sm:$0xff]
      %374 = vrot.lane.b32.xlu0 %v368, 125
      %v375 = vpop.permute.xlu0 %374
      %376 = vrot.lane.b32.xlu0 %v369, 125
      %v377 = vpop.permute.xlu0 %376
      %378 = vrot.lane.b32.xlu0 %v370, 125
      %v379 = vpop.permute.xlu0 %378
      %vm380 = vcmask 1022976
      %v381 = vsel %vm380, %v375, %v377
      %v382 = vsel %vm380, %v377, %v379
      %386 = vst [vmem:[#allocation3 + $0x48] sm:$0xff] %v381
      %387 = vst [vmem:[#allocation3 + $0x50] sm:$0xff] %v382
      %388 = vst.msk [vmem:[#allocation3 + $0x58] sm:$0xff] %vm324, %v379
      %v389 = vld [vmem:[#allocation2] sm:$0xff]
      %v390 = vld [vmem:[#allocation2 + $0x8] sm:$0xff]
      %v391 = vld [vmem:[#allocation2 + $0x10] sm:$0xff]
      %395 = vrot.lane.b32.xlu0 %v389, 124
      %v396 = vpop.permute.xlu0 %395
      %397 = vrot.lane.b32.xlu0 %v390, 124
      %v398 = vpop.permute.xlu0 %397
      %399 = vrot.lane.b32.xlu0 %v391, 124
      %v400 = vpop.permute.xlu0 %399
      %vm401 = vcmask 1014784
      %v402 = vsel %vm401, %v396, %v398
      %v403 = vsel %vm401, %v398, %v400
      %407 = vst [vmem:[#allocation3 + $0x60] sm:$0xff] %v402
      %408 = vst [vmem:[#allocation3 + $0x68] sm:$0xff] %v403
      %409 = vst.msk [vmem:[#allocation3 + $0x70] sm:$0xff] %vm324, %v400
      %v410 = vld [vmem:[#allocation2] sm:$0xff]
      %v411 = vld [vmem:[#allocation2 + $0x8] sm:$0xff]
      %v412 = vld [vmem:[#allocation2 + $0x10] sm:$0xff]
      %416 = vrot.lane.b32.xlu0 %v410, 108
      %v417 = vpop.permute.xlu0 %416
      %418 = vrot.lane.b32.xlu0 %v411, 108
      %v419 = vpop.permute.xlu0 %418
      %420 = vrot.lane.b32.xlu0 %v412, 108
      %v421 = vpop.permute.xlu0 %420
      %vm422 = vcmask 883712
      %v423 = vsel %vm422, %v417, %v419
      %v424 = vsel %vm422, %v419, %v421
      %428 = vst [vmem:[#allocation3 + $0x78] sm:$0xff] %v423
      %429 = vst [vmem:[#allocation3 + $0x80] sm:$0xff] %v424
      %430 = vst.msk [vmem:[#allocation3 + $0x88] sm:$0xff] %vm324, %v421
      %v431 = vld [vmem:[#allocation2] sm:$0xff]
      %v432 = vld [vmem:[#allocation2 + $0x8] sm:$0xff]
      %v433 = vld [vmem:[#allocation2 + $0x10] sm:$0xff]
      %437 = vrot.lane.b32.xlu0 %v431, 107
      %v438 = vpop.permute.xlu0 %437
      %439 = vrot.lane.b32.xlu0 %v432, 107
      %v440 = vpop.permute.xlu0 %439
      %441 = vrot.lane.b32.xlu0 %v433, 107
      %v442 = vpop.permute.xlu0 %441
      %vm443 = vcmask 875520
      %v444 = vsel %vm443, %v438, %v440
      %v445 = vsel %vm443, %v440, %v442
      %449 = vst [vmem:[#allocation3 + $0x90] sm:$0xff] %v444
      %450 = vst [vmem:[#allocation3 + $0x98] sm:$0xff] %v445
      %451 = vst.msk [vmem:[#allocation3 + $0xa0] sm:$0xff] %vm324, %v442
      %v452 = vld [vmem:[#allocation2] sm:$0xff]
      %v453 = vld [vmem:[#allocation2 + $0x8] sm:$0xff]
      %v454 = vld [vmem:[#allocation2 + $0x10] sm:$0xff]
      %458 = vrot.lane.b32.xlu0 %v452, 106
      %v459 = vpop.permute.xlu0 %458
      %460 = vrot.lane.b32.xlu0 %v453, 106
      %v461 = vpop.permute.xlu0 %460
      %462 = vrot.lane.b32.xlu0 %v454, 106
      %v463 = vpop.permute.xlu0 %462
      %vm464 = vcmask 867328
      %v465 = vsel %vm464, %v459, %v461
      %v466 = vsel %vm464, %v461, %v463
      %470 = vst [vmem:[#allocation3 + $0xa8] sm:$0xff] %v465
      %471 = vst [vmem:[#allocation3 + $0xb0] sm:$0xff] %v466
      %472 = vst.msk [vmem:[#allocation3 + $0xb8] sm:$0xff] %vm324, %v463
      %v473 = vld [vmem:[#allocation2] sm:$0xff]
      %v474 = vld [vmem:[#allocation2 + $0x8] sm:$0xff]
      %v475 = vld [vmem:[#allocation2 + $0x10] sm:$0xff]
      %479 = vrot.lane.b32.xlu0 %v473, 105
      %v480 = vpop.permute.xlu0 %479
      %481 = vrot.lane.b32.xlu0 %v474, 105
      %v482 = vpop.permute.xlu0 %481
      %483 = vrot.lane.b32.xlu0 %v475, 105
      %v484 = vpop.permute.xlu0 %483
      %vm485 = vcmask 859136
      %v486 = vsel %vm485, %v480, %v482
      %v487 = vsel %vm485, %v482, %v484
      %491 = vst [vmem:[#allocation3 + $0xc0] sm:$0xff] %v486
      %492 = vst [vmem:[#allocation3 + $0xc8] sm:$0xff] %v487
      %493 = vst.msk [vmem:[#allocation3 + $0xd0] sm:$0xff] %vm324, %v484
      %v494 = vld [vmem:[#allocation2] sm:$0xff]
      %v495 = vld [vmem:[#allocation2 + $0x8] sm:$0xff]
      %v496 = vld [vmem:[#allocation2 + $0x10] sm:$0xff]
      %500 = vrot.lane.b32.xlu0 %v494, 104
      %v501 = vpop.permute.xlu0 %500
      %502 = vrot.lane.b32.xlu0 %v495, 104
      %v503 = vpop.permute.xlu0 %502
      %504 = vrot.lane.b32.xlu0 %v496, 104
      %v505 = vpop.permute.xlu0 %504
      %vm506 = vcmask 850944
      %v507 = vsel %vm506, %v501, %v503
      %v508 = vsel %vm506, %v503, %v505
      %512 = vst [vmem:[#allocation3 + $0xd8] sm:$0xff] %v507
      %513 = vst [vmem:[#allocation3 + $0xe0] sm:$0xff] %v508
      %514 = vst.msk [vmem:[#allocation3 + $0xe8] sm:$0xff] %vm324, %v505
      %v515 = vld [vmem:[#allocation2] sm:$0xff]
      %v516 = vld [vmem:[#allocation2 + $0x8] sm:$0xff]
      %v517 = vld [vmem:[#allocation2 + $0x10] sm:$0xff]
      %521 = vrot.lane.b32.xlu0 %v515, 88
      %v522 = vpop.permute.xlu0 %521
      %523 = vrot.lane.b32.xlu0 %v516, 88
      %v524 = vpop.permute.xlu0 %523
      %525 = vrot.lane.b32.xlu0 %v517, 88
      %v526 = vpop.permute.xlu0 %525
      %vm527 = vcmask 719872
      %v528 = vsel %vm527, %v522, %v524
      %v529 = vsel %vm527, %v524, %v526
      %533 = vst [vmem:[#allocation3 + $0xf0] sm:$0xff] %v528
      %534 = vst [vmem:[#allocation3 + $0xf8] sm:$0xff] %v529
      %535 = vst.msk [vmem:[#allocation3 + $0x100] sm:$0xff] %vm324, %v526
      %v536 = vld [vmem:[#allocation2] sm:$0xff]
      %v537 = vld [vmem:[#allocation2 + $0x8] sm:$0xff]
      %v538 = vld [vmem:[#allocation2 + $0x10] sm:$0xff]
      %542 = vrot.lane.b32.xlu0 %v536, 87
      %v543 = vpop.permute.xlu0 %542
      %544 = vrot.lane.b32.xlu0 %v537, 87
      %v545 = vpop.permute.xlu0 %544
      %546 = vrot.lane.b32.xlu0 %v538, 87
      %v547 = vpop.permute.xlu0 %546
      %vm548 = vcmask 711680
      %v549 = vsel %vm548, %v543, %v545
      %v550 = vsel %vm548, %v545, %v547
      %554 = vst [vmem:[#allocation3 + $0x108] sm:$0xff] %v549
      %555 = vst [vmem:[#allocation3 + $0x110] sm:$0xff] %v550
      %556 = vst.msk [vmem:[#allocation3 + $0x118] sm:$0xff] %vm324, %v547
      %v557 = vld [vmem:[%s1] sm:$0xff]
      %v558 = vld [vmem:[#allocation3] sm:$0xff]
      %v559 = vld [vmem:[#allocation3 + $0x8] sm:$0xff]
      %v560 = vld [vmem:[#allocation3 + $0x10] sm:$0xff]
      %v561 = vld [vmem:[#allocation3 + $0x18] sm:$0xff]
      %v562 = vld [vmem:[#allocation3 + $0x20] sm:$0xff]
      %v563 = vld [vmem:[#allocation3 + $0x28] sm:$0xff]
      %v564 = vld [vmem:[#allocation3 + $0x30] sm:$0xff]
      %v565 = vld [vmem:[#allocation3 + $0x38] sm:$0xff]
      %v566 = vld [vmem:[#allocation3 + $0x40] sm:$0xff]
      %v567 = vld [vmem:[#allocation3 + $0x48] sm:$0xff]
      %v568 = vld [vmem:[#allocation3 + $0x50] sm:$0xff]
      %v569 = vld [vmem:[#allocation3 + $0x58] sm:$0xff]
      %v570 = vld [vmem:[#allocation3 + $0x60] sm:$0xff]
      %v571 = vld [vmem:[#allocation3 + $0x68] sm:$0xff]
      %v572 = vld [vmem:[#allocation3 + $0x70] sm:$0xff]
      %v573 = vld [vmem:[#allocation3 + $0x78] sm:$0xff]
      %v574 = vld [vmem:[#allocation3 + $0x80] sm:$0xff]
      %v575 = vld [vmem:[#allocation3 + $0x88] sm:$0xff]
      %v576 = vld [vmem:[#allocation3 + $0x90] sm:$0xff]
      %v577 = vld [vmem:[#allocation3 + $0x98] sm:$0xff]
      %v578 = vld [vmem:[#allocation3 + $0xa0] sm:$0xff]
      %v579 = vld [vmem:[#allocation3 + $0xa8] sm:$0xff]
      %v580 = vld [vmem:[#allocation3 + $0xb0] sm:$0xff]
      %v581 = vld [vmem:[#allocation3 + $0xb8] sm:$0xff]
      %v582 = vld [vmem:[#allocation3 + $0xc0] sm:$0xff]
      %v583 = vld [vmem:[#allocation3 + $0xc8] sm:$0xff]
      %v584 = vld [vmem:[#allocation3 + $0xd0] sm:$0xff]
      %v585 = vld [vmem:[#allocation3 + $0xd8] sm:$0xff]
      %v586 = vld [vmem:[#allocation3 + $0xe0] sm:$0xff]
      %v587 = vld [vmem:[#allocation3 + $0xe8] sm:$0xff]
      %v588 = vld [vmem:[#allocation3 + $0xf0] sm:$0xff]
      %v589 = vld [vmem:[#allocation3 + $0xf8] sm:$0xff]
      %v590 = vld [vmem:[#allocation3 + $0x100] sm:$0xff]
      %v591 = vld [vmem:[#allocation3 + $0x108] sm:$0xff]
      %v592 = vld [vmem:[#allocation3 + $0x110] sm:$0xff]
      %v593 = vld [vmem:[#allocation3 + $0x118] sm:$0xff]
      %v594 = vld [vmem:[%s2] sm:$0xff]
      %596 = vset.pattern.permute.xlu0 0
      %597 = vperm.xlu0 %596, %v594
      %v598 = vpop.permute.xlu0 %597
      %vm600 = vcmask 785408
      %v602 = vsel %vm600, %v557, 0
      %604 = vmatpush.msra.mxu0 0.0
      %605 = vmatpush.msra.mxu0 0.0
      %606 = vmatpush.msra.mxu0 0.0
      %607 = vmatpush.msra.mxu0 0.0
      %608 = vmatpush.msra.mxu0 %v591
      %609 = vmatpush.msra.mxu0 %v588
      %610 = vmatpush.msra.mxu0 %v585
      %611 = vmatpush.msra.mxu0 %v582
      %612 = vmatpush.msra.mxu0 %v579
      %613 = vmatpush.msra.mxu0 %v576
      %614 = vmatpush.msra.mxu0 %v573
      %615 = vmatpush.msra.mxu0 %v570
      %616 = vmatpush.msra.mxu0 %v567
      %617 = vmatpush.msra.mxu0 %v564
      %618 = vmatpush.msra.mxu0 %v561
      %619 = vmatpush.msra.mxu0 %v558
      %620 = vmatmul.f32.gmra.mxu0 %v602
      %v621 = vpop.f32.mrf.mxu0
      %v622 = vadd.f32 %v598, %v621
      %623 = vdwg.mxu0
      %624 = vmatpush.msra.mxu0 0.0
      %625 = vmatpush.msra.mxu0 0.0
      %626 = vmatpush.msra.mxu0 0.0
      %627 = vmatpush.msra.mxu0 0.0
      %628 = vmatpush.msra.mxu0 %v592
      %629 = vmatpush.msra.mxu0 %v589
      %630 = vmatpush.msra.mxu0 %v586
      %631 = vmatpush.msra.mxu0 %v583
      %632 = vmatpush.msra.mxu0 %v580
      %633 = vmatpush.msra.mxu0 %v577
      %634 = vmatpush.msra.mxu0 %v574
      %635 = vmatpush.msra.mxu0 %v571
      %636 = vmatpush.msra.mxu0 %v568
      %637 = vmatpush.msra.mxu0 %v565
      %638 = vmatpush.msra.mxu0 %v562
      %639 = vmatpush.msra.mxu0 %v559
      %640 = vmatmul.f32.gmra.mxu0 %v602
      %v641 = vpop.f32.mrf.mxu0
      %v642 = vadd.f32 %v598, %v641
      %643 = vdwg.mxu0
      %644 = vmatpush.msra.mxu0 0.0
      %645 = vmatpush.msra.mxu0 0.0
      %646 = vmatpush.msra.mxu0 0.0
      %647 = vmatpush.msra.mxu0 0.0
      %648 = vmatpush.msra.mxu0 %v593
      %649 = vmatpush.msra.mxu0 %v590
      %650 = vmatpush.msra.mxu0 %v587
      %651 = vmatpush.msra.mxu0 %v584
      %652 = vmatpush.msra.mxu0 %v581
      %653 = vmatpush.msra.mxu0 %v578
      %654 = vmatpush.msra.mxu0 %v575
      %655 = vmatpush.msra.mxu0 %v572
      %656 = vmatpush.msra.mxu0 %v569
      %657 = vmatpush.msra.mxu0 %v566
      %658 = vmatpush.msra.mxu0 %v563
      %659 = vmatpush.msra.mxu0 %v560
      %660 = vmatmul.f32.gmra.mxu0 %v602
      %v661 = vpop.f32.mrf.mxu0
      %v662 = vadd.f32 %v598, %v661
      %663 = vdwg.mxu0
      %vm664 = vcmp.gt.f32.partialorder %v622, 0.0
      %vm665 = vcmp.gt.f32.partialorder %v642, 0.0
      %vm666 = vcmp.gt.f32.partialorder %v662, 0.0
      %v667 = vld [vmem:[%s3] sm:$0xff]
      %669 = vset.pattern.permute.xlu0 0
      %670 = vperm.xlu0 %669, %v667
      %v671 = vpop.permute.xlu0 %670
      %v673 = vmul.f32 %v671, %v622
      %v674 = vmul.f32 %v671, %v642
      %v675 = vmul.f32 %v671, %v662
      %v676 = vsel %vm664, %v622, %v673
      %v677 = vsel %vm665, %v642, %v674
      %v678 = vsel %vm666, %v662, %v675
      %679 = vst.msk [vmem:[%s197] sm:$0xff] %vm201, %v676
      %681 = vrot.lane.b32.xlu0 %v676, 124
      %v682 = vpop.permute.xlu0 %681
      %vm684 = vcmask 261248
      %685 = vst.msk [vmem:[%s197] sm:$0xff] %vm684, %v682
      %686 = vrot.lane.b32.xlu0 %v676, 120
      %v687 = vpop.permute.xlu0 %686
      %vm689 = vcmask 392448
      %690 = vst.msk [vmem:[%s197] sm:$0xff] %vm689, %v687
      %691 = vrot.lane.b32.xlu0 %v676, 116
      %v692 = vpop.permute.xlu0 %691
      %vm694 = vcmask 523648
      %695 = vst.msk [vmem:[%s197] sm:$0xff] %vm694, %v692
      %696 = vrot.lane.b32.xlu0 %v676, 112
      %v697 = vpop.permute.xlu0 %696
      %vm699 = vcmask 654848
      %700 = vst.msk [vmem:[%s197] sm:$0xff] %vm699, %v697
      %701 = vrot.lane.b32.xlu0 %v676, 108
      %v702 = vpop.permute.xlu0 %701
      %vm704 = vcmask 786048
      %705 = vst.msk [vmem:[%s197] sm:$0xff] %vm704, %v702
      %707 = vrot.lane.b32.xlu0 %v676, 104
      %v708 = vpop.permute.xlu0 %707
      %709 = vrot.lane.b32.xlu0 %v677, 104
      %v710 = vpop.permute.xlu0 %709
      %v711 = vsel %vm506, %v708, %v710
      %vm713 = vcmask 917248
      %714 = vst.msk [vmem:[%s197] sm:$0xff] %vm713, %v711
      %715 = vrot.lane.b32.xlu0 %v677, 100
      %v716 = vpop.permute.xlu0 %715
      %vm718 = vcmask 1048448
      %719 = vst.msk [vmem:[%s197] sm:$0xff] %vm718, %v716
      %720 = vrot.lane.b32.xlu0 %v677, 96
      %v721 = vpop.permute.xlu0 %720
      %723 = vst.msk [vmem:[%s197 + $0x8] sm:$0xff] %vm201, %v721
      %724 = vrot.lane.b32.xlu0 %v677, 92
      %v725 = vpop.permute.xlu0 %724
      %727 = vst.msk [vmem:[%s197 + $0x8] sm:$0xff] %vm684, %v725
      %728 = vrot.lane.b32.xlu0 %v677, 88
      %v729 = vpop.permute.xlu0 %728
      %731 = vst.msk [vmem:[%s197 + $0x8] sm:$0xff] %vm689, %v729
      %732 = vrot.lane.b32.xlu0 %v677, 84
      %v733 = vpop.permute.xlu0 %732
      %735 = vst.msk [vmem:[%s197 + $0x8] sm:$0xff] %vm694, %v733
      %736 = vrot.lane.b32.xlu0 %v677, 80
      %v737 = vpop.permute.xlu0 %736
      %739 = vst.msk [vmem:[%s197 + $0x8] sm:$0xff] %vm699, %v737
      %741 = vrot.lane.b32.xlu0 %v678, 76
      %v742 = vpop.permute.xlu0 %741
      %744 = vst.msk [vmem:[%s197 + $0x8] sm:$0xff] %vm704, %v742
      %745 = vrot.lane.b32.xlu0 %v678, 72
      %v746 = vpop.permute.xlu0 %745
      %748 = vst.msk [vmem:[%s197 + $0x8] sm:$0xff] %vm713, %v746
      %749 = vrot.lane.b32.xlu0 %v678, 68
      %v750 = vpop.permute.xlu0 %749
      %752 = vst.msk [vmem:[%s197 + $0x8] sm:$0xff] %vm718, %v750
      %p753 = scmp.lt.s32.totalorder %s15, 1
      %s754 = scalar_select %p753, %s15, 1
      %s755 = smul.addr %s754, 2
      %s756 = smul.addr %s755, 8
      %s757 = scalar_lea.vmem %s4, %s756
      // Predicated region
      $region37: #{entropy_conv_forward.1} parent=35 // pred_check
        %p758 = pneg %p122
      $region38: #{entropy_conv_forward.1} parent=35 // pred_check_branch
        %760 = sbr.rel (%p758) target = $region40
      $region39: #{entropy_conv_forward.1} parent=35 // pred_region
        _
      $region40: #{entropy_conv_forward.1} parent=35 // pred_fallthru
        _
    $region36: #{entropy_conv_forward.1} parent=5 // pred_fallthru
      _
    %p761 = scmp.le.s32.totalorder 2, %s10
    // Predicated region
    $region41: #{entropy_conv_forward.1} parent=5 // pred_check
      %p762 = pneg %p761
    $region42: #{entropy_conv_forward.1} parent=5 // pred_check_branch
      %764 = sbr.rel (%p762) target = $region44
    $region43: #{entropy_conv_forward.1} parent=5 // pred_region
      %s765 = ssub.s32 %s10, 2
      // Predicated region
      $region45: #{entropy_conv_forward.1} parent=43 // pred_check
        %p766 = pneg %p128
      $region46: #{entropy_conv_forward.1} parent=43 // pred_check_branch
        %768 = sbr.rel (%p766) target = $region48
      $region47: #{entropy_conv_forward.1} parent=43 // pred_region
        %p769 = scmp.lt.s32.totalorder %s16, 1
        %s770 = scalar_select %p769, %s16, 1
        %s771 = smul.addr %s770, 2
        %s772 = smul.addr %s771, 8
        %s773 = scalar_lea.vmem %s4, %s772
      $region48: #{entropy_conv_forward.1} parent=43 // pred_fallthru
        _
    $region44: #{entropy_conv_forward.1} parent=5 // pred_fallthru
      _
  $region6: #{entropy_conv_forward.1} parent=0 // loop_footer
    %s14 = sadd.s32 1, %s10
  $region7: #{entropy_conv_forward.1} parent=0 // loop_footer_branch
    %9 = sbr.rel target = $region3
  $region8: #{entropy_conv_forward.1} parent=0 // loop_exit
    _

</llo_original>
